<compile_context>
chip_gen: v7x
topology: tpu7x:2x2x1
jax: 0.10.0
libtpu: 0.0.40
codegen_flags: <defaults>
</compile_context>

<pallas_src>
import math

import jax
import jax.numpy as jnp
from jax.experimental import pallas as pl
from jax.experimental.pallas import tpu as pltpu


def _round_up(x, m):
    return ((x + m - 1) // m) * m


def gcn_kernel(adj_ref, x_ref, w_ref, b_lin_ref, b_gcn_ref, out_ref, support_ref):
    # support = x @ W.T + b_lin, computed exactly once (first row tile) into a
    # persistent VMEM scratch; every later row tile reuses it.  Requires the
    # row grid axis to run sequentially ("arbitrary").
    @pl.when(pl.program_id(0) == 0)
    def _():
        support = jax.lax.dot_general(
            x_ref[...],
            w_ref[...],
            # Contract in_features of x with in_features of W (W is [out, in]),
            # i.e. x @ W.T without materializing a transpose.
            dimension_numbers=(((1,), (1,)), ((), ())),
            preferred_element_type=jnp.float32,
        ) + b_lin_ref[...]
        support_ref[...] = support.astype(support_ref.dtype)

    # output_tile = adj_tile @ support + b_gcn   (f32 accumulation on the MXU)
    out = jnp.dot(
        adj_ref[...], support_ref[...], preferred_element_type=jnp.float32
    ) + b_gcn_ref[...]
    out_ref[...] = out.astype(out_ref.dtype)


def gcn_forward(adj, x, w_lin, b_lin, b_gcn, *, block_rows=512, matmul_dtype=None):
    """GCN layer forward.

    adj: [N, N], x: [N, in_f], w_lin: [out_f, in_f], b_lin: [1, out_f],
    b_gcn: [1, out_f]  ->  [N, out_f] (float32).
    """
    N, in_f = x.shape
    out_f = w_lin.shape[0]

    cdt = jnp.float32 if matmul_dtype is None else matmul_dtype
    c_itemsize = jnp.dtype(cdt).itemsize

    # Lane-dense feature dims (multiples of 128); zero padding the contraction
    # dim (in_f) does not change results.
    if_pad = _round_up(in_f, 128)
    of_pad = _round_up(out_f, 128)

    # Row tile: multiple of 8 sublanes, as large as sensible (per-step overhead
    # ~0.35us).  block_rows=512 is a good v5e/v6e default; halve (or use bf16)
    # on v7x for its 64 MiB VMEM.
    tm = min(block_rows, _round_up(N, 8))
    n_pad = _round_up(N, tm)

    # Zero-pad everything.  Padded x rows give support rows == b_lin, but the
    # corresponding adj columns are zero, so real output rows are unaffected;
    # padded output rows/cols are sliced away at the end.
    adj_p = jnp.pad(adj.astype(cdt), ((0, n_pad - N), (0, n_pad - N)))
    x_p = jnp.pad(x.astype(cdt), ((0, n_pad - N), (0, if_pad - in_f)))
    w_p = jnp.pad(w_lin.astype(cdt), ((0, of_pad - out_f), (0, if_pad - in_f)))
    b_lin_p = jnp.pad(b_lin.astype(jnp.float32), ((0, 0), (0, of_pad - out_f)))
    b_gcn_p = jnp.pad(b_gcn.astype(jnp.float32), ((0, 0), (0, of_pad - out_f)))

    grid = (n_pad // tm,)

    # VMEM budget derived from the tile plan (double-buffered streaming adj and
    # output tiles, resident x / W / biases, plus the support scratch), capped
    # at 64 MiB so the same plan is safe on v7x as well as v5e/v6e.
    est = (
        2 * tm * n_pad * c_itemsize          # adj row tiles (double-buffered)
        + 2 * n_pad * if_pad * c_itemsize    # x (resident, 2 bufs allocated)
        + 2 * of_pad * if_pad * c_itemsize   # W (resident, 2 bufs allocated)
        + 4 * of_pad * 4                     # biases
        + 2 * tm * of_pad * 4                # output tiles (double-buffered)
        + n_pad * of_pad * c_itemsize        # support scratch
    )
    vmem_limit = min(max(int(est * 1.3), 32 * 1024 * 1024), 64 * 1024 * 1024)

    out_padded = pl.pallas_call(
        gcn_kernel,
        out_shape=jax.ShapeDtypeStruct((n_pad, of_pad), jnp.float32),
        grid_spec=pltpu.PrefetchScalarGridSpec(
            num_scalar_prefetch=0,
            grid=grid,
            in_specs=[
                pl.BlockSpec((tm, n_pad), lambda i: (i, 0)),       # adj row tile
                pl.BlockSpec((n_pad, if_pad), lambda i: (0, 0)),   # x   (resident)
                pl.BlockSpec((of_pad, if_pad), lambda i: (0, 0)),  # W   (resident)
                pl.BlockSpec((1, of_pad), lambda i: (0, 0)),       # b_lin
                pl.BlockSpec((1, of_pad), lambda i: (0, 0)),       # b_gcn
            ],
            out_specs=pl.BlockSpec((tm, of_pad), lambda i: (i, 0)),
            scratch_shapes=[pltpu.VMEM((n_pad, of_pad), cdt)],     # support
        ),
        compiler_params=pltpu.CompilerParams(
            # "arbitrary": the support scratch is written at step 0 and reused,
            # so row tiles must run sequentially on one core.  (For megacore
            # sharding on v7x, recompute support per step and mark this axis
            # "parallel" instead.)
            dimension_semantics=("arbitrary",),
            vmem_limit_bytes=vmem_limit,
        ),
    )(adj_p, x_p, w_p, b_lin_p, b_gcn_p)

    return out_padded[:N, :out_f]


def init_params(key, in_features, out_features):
    """Deterministic parameter init mirroring the PyTorch module's __init__."""
    k_w, k_b, k_gb = jax.random.split(key, 3)
    # nn.Linear default init: U(-1/sqrt(in), 1/sqrt(in)) for weight and bias.
    lin_bound = 1.0 / math.sqrt(in_features)
    w_lin = jax.random.uniform(
        k_w, (out_features, in_features), jnp.float32, -lin_bound, lin_bound
    )
    b_lin = jax.random.uniform(
        k_b, (1, out_features), jnp.float32, -lin_bound, lin_bound
    )
    # xavier_uniform_ on a (1, out_features) tensor with gain=1.414:
    # fan_in = out_features, fan_out = 1.
    gcn_bound = 1.414 * math.sqrt(6.0 / (out_features + 1))
    b_gcn = jax.random.uniform(
        k_gb, (1, out_features), jnp.float32, -gcn_bound, gcn_bound
    )
    return w_lin, b_lin, b_gcn


if __name__ == "__main__":
    key = jax.random.PRNGKey(0)
    N = 64            # number of graph nodes
    in_features = 32
    out_features = 16

    k_adj, k_x, k_params = jax.random.split(key, 3)

    # Dense (row-normalized) adjacency matrix and node features.
    adj_raw = jax.random.uniform(k_adj, (N, N), jnp.float32)
    adj = adj_raw / jnp.sum(adj_raw, axis=1, keepdims=True)
    x = jax.random.normal(k_x, (N, in_features), jnp.float32)

    w_lin, b_lin, b_gcn = init_params(k_params, in_features, out_features)

    out = gcn_forward(adj, x, w_lin, b_lin, b_gcn)
    out = jax.block_until_ready(out)

    # Pure-JAX reference check (f32 path).
    support_ref = x @ w_lin.T + b_lin
    out_ref = adj @ support_ref + b_gcn
    assert out.shape == (N, out_features)
    assert jnp.allclose(out, out_ref, atol=1e-5, rtol=1e-5)

    print("KERNEL_OK")
</pallas_src>

<mosaic_0001>
module attributes {stable_mosaic.version = 11 : i64} {
  func.func @gcn_kernel(%arg0: i32, %arg1: memref<64x64xf32, #tpu.memory_space<vmem>>, %arg2: memref<64x128xf32, #tpu.memory_space<vmem>>, %arg3: memref<128x128xf32, #tpu.memory_space<vmem>>, %arg4: memref<1x128xf32, #tpu.memory_space<vmem>>, %arg5: memref<1x128xf32, #tpu.memory_space<vmem>>, %arg6: memref<64x128xf32, #tpu.memory_space<vmem>>, %arg7: memref<64x128xf32, #tpu.memory_space<vmem>>) attributes {dimension_semantics = [#tpu.dimension_semantics<arbitrary>], iteration_bounds = array<i64: 1>, scalar_prefetch = 0 : i64, scratch_operands = 1 : i64, tpu.core_type = #tpu.core_type<tc>, window_params = [{transform_indices = @transform_0, window_bounds = array<i64: 64, 64>}, {pipeline_mode = #tpu.pipeline_mode<synchronous>, transform_indices = @transform_1, window_bounds = array<i64: 64, 128>}, {pipeline_mode = #tpu.pipeline_mode<synchronous>, transform_indices = @transform_2, window_bounds = array<i64: 128, 128>}, {pipeline_mode = #tpu.pipeline_mode<synchronous>, transform_indices = @transform_3, window_bounds = array<i64: 1, 128>}, {pipeline_mode = #tpu.pipeline_mode<synchronous>, transform_indices = @transform_4, window_bounds = array<i64: 1, 128>}, {transform_indices = @transform_5, window_bounds = array<i64: 64, 128>}]} {
    %c0_i32 = arith.constant 0 : i32
    %0 = arith.cmpi eq, %arg0, %c0_i32 : i32
    %1 = arith.extui %0 : i1 to i32
    %c0_i32_0 = arith.constant 0 : i32
    %2 = arith.cmpi ne, %1, %c0_i32_0 : i32
    scf.if %2 {
      %c0_8 = arith.constant 0 : index
      %c0_9 = arith.constant 0 : index
      %10 = vector.load %arg2[%c0_8, %c0_9] : memref<64x128xf32, #tpu.memory_space<vmem>>, vector<64x128xf32>
      %c0_10 = arith.constant 0 : index
      %c0_11 = arith.constant 0 : index
      %11 = vector.load %arg3[%c0_10, %c0_11] : memref<128x128xf32, #tpu.memory_space<vmem>>, vector<128x128xf32>
      %cst_12 = arith.constant dense<0.000000e+00> : vector<64x128xf32>
      %12 = tpu.matmul %10, %11, %cst_12 {dimension_numbers = #tpu.dot_dimension_numbers<[1], [1], [0], [0], [0, 0, 1, 0], [], []>} : vector<64x128xf32>, vector<128x128xf32>, vector<64x128xf32> -> vector<64x128xf32>
      %c0_13 = arith.constant 0 : index
      %c0_14 = arith.constant 0 : index
      %13 = vector.load %arg4[%c0_13, %c0_14] : memref<1x128xf32, #tpu.memory_space<vmem>>, vector<1x128xf32>
      %14 = vector.broadcast %13 : vector<1x128xf32> to vector<64x128xf32>
      %15 = arith.addf %12, %14 : vector<64x128xf32>
      %c0_15 = arith.constant 0 : index
      %c0_16 = arith.constant 0 : index
      %16 = vector.load %arg7[%c0_15, %c0_16] : memref<64x128xf32, #tpu.memory_space<vmem>>, vector<64x128xf32>
      tpu.vector_store %arg7[%c0_15, %c0_16], %15 {strides = array<i32>} : memref<64x128xf32, #tpu.memory_space<vmem>>, vector<64x128xf32>,
    } else {
    }
    %c0 = arith.constant 0 : index
    %c0_1 = arith.constant 0 : index
    %3 = vector.load %arg1[%c0, %c0_1] : memref<64x64xf32, #tpu.memory_space<vmem>>, vector<64x64xf32>
    %c0_2 = arith.constant 0 : index
    %c0_3 = arith.constant 0 : index
    %4 = vector.load %arg7[%c0_2, %c0_3] : memref<64x128xf32, #tpu.memory_space<vmem>>, vector<64x128xf32>
    %cst = arith.constant dense<0.000000e+00> : vector<64x128xf32>
    %5 = tpu.matmul %3, %4, %cst {dimension_numbers = #tpu.dot_dimension_numbers<[1], [0], [0], [1], [0, 0, 1, 1], [], []>} : vector<64x64xf32>, vector<64x128xf32>, vector<64x128xf32> -> vector<64x128xf32>
    %c0_4 = arith.constant 0 : index
    %c0_5 = arith.constant 0 : index
    %6 = vector.load %arg5[%c0_4, %c0_5] : memref<1x128xf32, #tpu.memory_space<vmem>>, vector<1x128xf32>
    %7 = vector.broadcast %6 : vector<1x128xf32> to vector<64x128xf32>
    %8 = arith.addf %5, %7 : vector<64x128xf32>
    %c0_6 = arith.constant 0 : index
    %c0_7 = arith.constant 0 : index
    %9 = vector.load %arg6[%c0_6, %c0_7] : memref<64x128xf32, #tpu.memory_space<vmem>>, vector<64x128xf32>
    tpu.vector_store %arg6[%c0_6, %c0_7], %8 {strides = array<i32>} : memref<64x128xf32, #tpu.memory_space<vmem>>, vector<64x128xf32>,
    return
  }
  func.func @transform_0(%arg0: i32) -> (i32, i32) {
    %c0_i32 = arith.constant 0 : i32
    %c0_i32_0 = arith.constant 0 : i32
    return %arg0, %c0_i32 : i32, i32
  }
  func.func @transform_1(%arg0: i32) -> (i32, i32) {
    %c0_i32 = arith.constant 0 : i32
    %c0_i32_0 = arith.constant 0 : i32
    %c0_i32_1 = arith.constant 0 : i32
    return %c0_i32, %c0_i32_0 : i32, i32
  }
  func.func @transform_2(%arg0: i32) -> (i32, i32) {
    %c0_i32 = arith.constant 0 : i32
    %c0_i32_0 = arith.constant 0 : i32
    %c0_i32_1 = arith.constant 0 : i32
    return %c0_i32, %c0_i32_0 : i32, i32
  }
  func.func @transform_3(%arg0: i32) -> (i32, i32) {
    %c0_i32 = arith.constant 0 : i32
    %c0_i32_0 = arith.constant 0 : i32
    %c0_i32_1 = arith.constant 0 : i32
    return %c0_i32, %c0_i32_0 : i32, i32
  }
  func.func @transform_4(%arg0: i32) -> (i32, i32) {
    %c0_i32 = arith.constant 0 : i32
    %c0_i32_0 = arith.constant 0 : i32
    %c0_i32_1 = arith.constant 0 : i32
    return %c0_i32, %c0_i32_0 : i32, i32
  }
  func.func @transform_5(%arg0: i32) -> (i32, i32) {
    %c0_i32 = arith.constant 0 : i32
    %c0_i32_0 = arith.constant 0 : i32
    return %arg0, %c0_i32 : i32, i32
  }
}

</mosaic_0001>

<llo_original>
// kernel: tpu_custom_call.1
$region0: #{tpu_custom_call.1}
  #allocation0 [shape = 'u32[]', space=smem, size = 0x4, offset = 0x4, fixed_abs, tag = 'smem constant byte address 0x4 - core index']
  #allocation1 [shape = 'u32[144,128]{1,0:T(1,128)}', space=vmem, size = 0x12000, scoped, tag = 'internal scratch']
  #allocation2 [shape = 'f32[64,128]{1,0:T(8,128)}', space=vmem, size = 0x8000, scoped, tag = 'scratch operand']
  %s0 = inlined_call_operand.hbm [shape: f32[64,64], index: 0, kind: input, shape index: {}]
  %s1 = inlined_call_operand.hbm [shape: f32[64,128], index: 1, kind: input, shape index: {}]
  %s2 = inlined_call_operand.hbm [shape: f32[128,128], index: 2, kind: input, shape index: {}]
  %s3 = inlined_call_operand.vmem [shape: f32[1,128], index: 3, kind: input, shape index: {}]
  %s4 = inlined_call_operand.vmem [shape: f32[1,128], index: 4, kind: input, shape index: {}]
  %s5 = inlined_call_operand.hbm [shape: f32[64,128], index: 5, kind: output, shape index: {}]
  %s6 = sld [smem:[#allocation0]]
  $region46: #{tpu_custom_call.1} parent=0
    _
  %s8 = ssub.s32 1, %s6
  %s9 = scalar_select 0, %s8, %s6
  $region1: #{tpu_custom_call.1} parent=0
    #allocation3 [shape = 'u8[32768]{0}', space=vmem, size = 0x8000, scoped, tag = 'input window, operand 0, single buffered']
    #allocation4 [shape = 's32[1]{0}', space=sflag, size = 0x4, scoped, tag = 'scoped memory for tpu_custom_call.1']
    #allocation5 [shape = 's32[1]{0}', space=sflag, size = 0x4, scoped, tag = 'scoped memory for tpu_custom_call.1']
    #allocation6 [shape = 'u8[32768]{0}', space=vmem, size = 0x8000, scoped, tag = 'input window, operand 1, single buffered']
    #allocation7 [shape = 's32[1]{0}', space=sflag, size = 0x4, scoped, tag = 'scoped memory for tpu_custom_call.1']
    #allocation8 [shape = 'u8[65536]{0}', space=vmem, size = 0x10000, scoped, tag = 'input window, operand 2, single buffered']
    #allocation9 [shape = 'u8[32768]{0}', space=vmem, size = 0x8000, scoped, tag = 'output window, operand 0, single buffered']
    %10 = vsyncpa [#allocation4], 0
    %11 = vsyncpa [#allocation7], 0
    %12 = vsyncpa [#allocation5], 0
    // Predicated region
    $region2: #{tpu_custom_call.1} parent=1 // pred_check
      _
    $region3: #{tpu_custom_call.1} parent=1 // pred_check_branch
      %14 = sbr.rel (0) target = $region5
    $region4: #{tpu_custom_call.1} parent=1 // pred_region
      %s16 = ssub.s32 1024, 1024
      %17 = vsyncadd [#allocation4], %s16
      %s18 = sshll.u32 [#allocation3], 4
      %s19 = int_to_ptr.vmem [resolvable:$true] %s18
      %24 = dma.hbm_to_vmem [thread:$0]  %s0, 1024, %s19, [#allocation4], 128, 128, 8
    $region5: #{tpu_custom_call.1} parent=1 // pred_fallthru
      _
    // Predicated region
    $region6: #{tpu_custom_call.1} parent=1 // pred_check
      _
    $region7: #{tpu_custom_call.1} parent=1 // pred_check_branch
      %26 = sbr.rel (0) target = $region9
    $region8: #{tpu_custom_call.1} parent=1 // pred_region
      %s28 = ssub.s32 1024, 1024
      %29 = vsyncadd [#allocation7], %s28
      %s30 = sshll.u32 [#allocation6], 4
      %s31 = int_to_ptr.vmem [resolvable:$true] %s30
      %36 = dma.hbm_to_vmem [thread:$0]  %s1, 1024, %s31, [#allocation7], 128, 128, 8
    $region9: #{tpu_custom_call.1} parent=1 // pred_fallthru
      _
    // Predicated region
    $region10: #{tpu_custom_call.1} parent=1 // pred_check
      _
    $region11: #{tpu_custom_call.1} parent=1 // pred_check_branch
      %38 = sbr.rel (0) target = $region13
    $region12: #{tpu_custom_call.1} parent=1 // pred_region
      %s40 = ssub.s32 2048, 2048
      %41 = vsyncadd [#allocation7], %s40
      %s42 = sshll.u32 [#allocation8], 4
      %s43 = int_to_ptr.vmem [resolvable:$true] %s42
      %48 = dma.hbm_to_vmem [thread:$0]  %s2, 2048, %s43, [#allocation7], 128, 128, 8
    $region13: #{tpu_custom_call.1} parent=1 // pred_fallthru
      _
    // Predicated region
    $region14: #{tpu_custom_call.1} parent=1 // pred_check
      _
    $region15: #{tpu_custom_call.1} parent=1 // pred_check_branch
      %50 = sbr.rel (0) target = $region17
    $region16: #{tpu_custom_call.1} parent=1 // pred_region
      _
    $region17: #{tpu_custom_call.1} parent=1 // pred_fallthru
      _
    // Predicated region
    $region18: #{tpu_custom_call.1} parent=1 // pred_check
      _
    $region19: #{tpu_custom_call.1} parent=1 // pred_check_branch
      %52 = sbr.rel (0) target = $region21
    $region20: #{tpu_custom_call.1} parent=1 // pred_region
      _
    $region21: #{tpu_custom_call.1} parent=1 // pred_fallthru
      _
    // Predicated region
    $region22: #{tpu_custom_call.1} parent=1 // pred_check
      _
    $region23: #{tpu_custom_call.1} parent=1 // pred_check_branch
      %54 = sbr.rel (0) target = $region25
    $region24: #{tpu_custom_call.1} parent=1 // pred_region
      %55 = dma.done [#allocation4], 1024
    $region25: #{tpu_custom_call.1} parent=1 // pred_fallthru
      _
    // Predicated region
    $region26: #{tpu_custom_call.1} parent=1 // pred_check
      _
    $region27: #{tpu_custom_call.1} parent=1 // pred_check_branch
      %57 = sbr.rel (0) target = $region29
    $region28: #{tpu_custom_call.1} parent=1 // pred_region
      %58 = dma.done [#allocation7], 1024
    $region29: #{tpu_custom_call.1} parent=1 // pred_fallthru
      _
    // Predicated region
    $region30: #{tpu_custom_call.1} parent=1 // pred_check
      _
    $region31: #{tpu_custom_call.1} parent=1 // pred_check_branch
      %60 = sbr.rel (0) target = $region33
    $region32: #{tpu_custom_call.1} parent=1 // pred_region
      %61 = dma.done [#allocation7], 2048
    $region33: #{tpu_custom_call.1} parent=1 // pred_fallthru
      _
    %p62 = scmp.eq.s32.totalorder 0, 0
    // Predicated region
    $region34: #{tpu_custom_call.1} parent=1 // pred_check
      %p63 = pneg %p62
    $region35: #{tpu_custom_call.1} parent=1 // pred_check_branch
      %65 = sbr.rel (%p63) target = $region37
    $region36: #{tpu_custom_call.1} parent=1 // pred_region
      %v66 = vld [vmem:[#allocation6] sm:$0xff]
      %v67 = vld [vmem:[#allocation6 + $0x8] sm:$0xff]
      %v68 = vld [vmem:[#allocation6 + $0x10] sm:$0xff]
      %v69 = vld [vmem:[#allocation6 + $0x18] sm:$0xff]
      %v70 = vld [vmem:[#allocation6 + $0x20] sm:$0xff]
      %v71 = vld [vmem:[#allocation6 + $0x28] sm:$0xff]
      %v72 = vld [vmem:[#allocation6 + $0x30] sm:$0xff]
      %v73 = vld [vmem:[#allocation6 + $0x38] sm:$0xff]
      %v74 = vld [vmem:[#allocation8] sm:$0xff]
      %v75 = vld [vmem:[#allocation8 + $0x8] sm:$0xff]
      %v76 = vld [vmem:[#allocation8 + $0x10] sm:$0xff]
      %v77 = vld [vmem:[#allocation8 + $0x18] sm:$0xff]
      %v78 = vld [vmem:[#allocation8 + $0x20] sm:$0xff]
      %v79 = vld [vmem:[#allocation8 + $0x28] sm:$0xff]
      %v80 = vld [vmem:[#allocation8 + $0x30] sm:$0xff]
      %v81 = vld [vmem:[#allocation8 + $0x38] sm:$0xff]
      %v82 = vld [vmem:[#allocation8 + $0x40] sm:$0xff]
      %v83 = vld [vmem:[#allocation8 + $0x48] sm:$0xff]
      %v84 = vld [vmem:[#allocation8 + $0x50] sm:$0xff]
      %v85 = vld [vmem:[#allocation8 + $0x58] sm:$0xff]
      %v86 = vld [vmem:[#allocation8 + $0x60] sm:$0xff]
      %v87 = vld [vmem:[#allocation8 + $0x68] sm:$0xff]
      %v88 = vld [vmem:[#allocation8 + $0x70] sm:$0xff]
      %v89 = vld [vmem:[#allocation8 + $0x78] sm:$0xff]
      %v90 = vld [vmem:[%s3] sm:$0x1]
      %v92 = vlaneseq
      %v93 = vshrl.u32 %v92, 7
      %v94 = vsub.s32 0, %v93
      %v95 = vrot.slane %v90, %v94
      %97 = vmatprep.subr.mxu0 0.0
      %98 = vmatpush1.xpose.msra.mxu0 %v74
      %99 = vmatprep.subr.mxu0 0.0
      %100 = vmatpush1.xpose.msra.mxu0 %v75
      %101 = vmatprep.subr.mxu0 0.0
      %102 = vmatpush1.xpose.msra.mxu0 %v76
      %103 = vmatprep.subr.mxu0 0.0
      %104 = vmatpush1.xpose.msra.mxu0 %v77
      %105 = vmatprep.subr.mxu0 0.0
      %106 = vmatpush1.xpose.msra.mxu0 %v78
      %107 = vmatprep.subr.mxu0 0.0
      %108 = vmatpush1.xpose.msra.mxu0 %v79
      %109 = vmatprep.subr.mxu0 0.0
      %110 = vmatpush1.xpose.msra.mxu0 %v80
      %111 = vmatprep.subr.mxu0 0.0
      %112 = vmatpush1.xpose.msra.mxu0 %v81
      %113 = vmatprep.subr.mxu0 0.0
      %114 = vmatpush1.xpose.msra.mxu0 %v82
      %115 = vmatprep.subr.mxu0 0.0
      %116 = vmatpush1.xpose.msra.mxu0 %v83
      %117 = vmatprep.subr.mxu0 0.0
      %118 = vmatpush1.xpose.msra.mxu0 %v84
      %119 = vmatprep.subr.mxu0 0.0
      %120 = vmatpush1.xpose.msra.mxu0 %v85
      %121 = vmatprep.subr.mxu0 0.0
      %122 = vmatpush1.xpose.msra.mxu0 %v86
      %123 = vmatprep.subr.mxu0 0.0
      %124 = vmatpush1.xpose.msra.mxu0 %v87
      %125 = vmatprep.subr.mxu0 0.0
      %126 = vmatpush1.xpose.msra.mxu0 %v88
      %127 = vmatprep.subr.mxu0 0.0
      %128 = vmatpush1.xpose.msra.mxu0 %v89
      %129 = vmatprep.subr.mxu0 0.0
      %130 = vmatpush1.xpose.msra.mxu0 0.0
      %131 = vmatprep.subr.mxu0 0.0
      %132 = vmatpush1.xpose.msra.mxu0 0.0
      %133 = vmatprep.subr.mxu0 0.0
      %134 = vmatpush1.xpose.msra.mxu0 0.0
      %135 = vmatprep.subr.mxu0 0.0
      %136 = vmatpush1.xpose.msra.mxu0 0.0
      %137 = vmatprep.subr.mxu0 0.0
      %138 = vmatpush1.xpose.msra.mxu0 0.0
      %139 = vmatprep.subr.mxu0 0.0
      %140 = vmatpush1.xpose.msra.mxu0 0.0
      %141 = vmatprep.subr.mxu0 0.0
      %142 = vmatpush1.xpose.msra.mxu0 0.0
      %143 = vmatprep.subr.mxu0 0.0
      %144 = vmatpush1.xpose.msra.mxu0 0.0
      %145 = vmatprep.subr.mxu0 0.0
      %146 = vmatpush1.xpose.msra.mxu0 0.0
      %147 = vmatprep.subr.mxu0 0.0
      %148 = vmatpush1.xpose.msra.mxu0 0.0
      %149 = vmatprep.subr.mxu0 0.0
      %150 = vmatpush1.xpose.msra.mxu0 0.0
      %151 = vmatprep.subr.mxu0 0.0
      %152 = vmatpush1.xpose.msra.mxu0 0.0
      %153 = vmatprep.subr.mxu0 0.0
      %154 = vmatpush1.xpose.msra.mxu0 0.0
      %155 = vmatprep.subr.mxu0 0.0
      %156 = vmatpush1.xpose.msra.mxu0 0.0
      %157 = vmatprep.subr.mxu0 0.0
      %158 = vmatpush1.xpose.msra.mxu0 0.0
      %159 = vmatprep.subr.mxu0 0.0
      %160 = vmatpush1.xpose.msra.mxu0 0.0
      %161 = vmatprep.mubr.f32.mxu0 0.0
      %162 = vmatmul.mubr.f32.gmra.mrb[0].mxu0 %v66
      %v163 = vpop.f32.mrb[0].mxu0
      %v164 = vadd.f32 %v95, %v163
      %v165 = vpop.f32.mrb[0].mxu0
      %166 = vmatprep.mubr.f32.mxu0 0.0
      %167 = vmatmul.mubr.f32.gmra.mrb[0].mxu0 %v67
      %v168 = vpop.f32.mrb[0].mxu0
      %v169 = vadd.f32 %v95, %v168
      %v170 = vpop.f32.mrb[0].mxu0
      %171 = vmatprep.mubr.f32.mxu0 0.0
      %172 = vmatmul.mubr.f32.gmra.mrb[0].mxu0 %v68
      %v173 = vpop.f32.mrb[0].mxu0
      %v174 = vadd.f32 %v95, %v173
      %v175 = vpop.f32.mrb[0].mxu0
      %176 = vmatprep.mubr.f32.mxu0 0.0
      %177 = vmatmul.mubr.f32.gmra.mrb[0].mxu0 %v69
      %v178 = vpop.f32.mrb[0].mxu0
      %v179 = vadd.f32 %v95, %v178
      %v180 = vpop.f32.mrb[0].mxu0
      %181 = vmatprep.mubr.f32.mxu0 0.0
      %182 = vmatmul.mubr.f32.gmra.mrb[0].mxu0 %v70
      %v183 = vpop.f32.mrb[0].mxu0
      %v184 = vadd.f32 %v95, %v183
      %v185 = vpop.f32.mrb[0].mxu0
      %186 = vmatprep.mubr.f32.mxu0 0.0
      %187 = vmatmul.mubr.f32.gmra.mrb[0].mxu0 %v71
      %v188 = vpop.f32.mrb[0].mxu0
      %v189 = vadd.f32 %v95, %v188
      %v190 = vpop.f32.mrb[0].mxu0
      %191 = vmatprep.mubr.f32.mxu0 0.0
      %192 = vmatmul.mubr.f32.gmra.mrb[0].mxu0 %v72
      %v193 = vpop.f32.mrb[0].mxu0
      %v194 = vadd.f32 %v95, %v193
      %v195 = vpop.f32.mrb[0].mxu0
      %196 = vmatprep.mubr.f32.mxu0 0.0
      %197 = vmatmul.mubr.f32.gmra.mrb[0].mxu0 %v73
      %v198 = vpop.f32.mrb[0].mxu0
      %v199 = vadd.f32 %v95, %v198
      %v200 = vpop.f32.mrb[0].mxu0
      %201 = vdwg.mxu0
      %202 = vst [vmem:[#allocation2] sm:$0xff] %v164
      %203 = vst [vmem:[#allocation2 + $0x8] sm:$0xff] %v169
      %204 = vst [vmem:[#allocation2 + $0x10] sm:$0xff] %v174
      %205 = vst [vmem:[#allocation2 + $0x18] sm:$0xff] %v179
      %206 = vst [vmem:[#allocation2 + $0x20] sm:$0xff] %v184
      %207 = vst [vmem:[#allocation2 + $0x28] sm:$0xff] %v189
      %208 = vst [vmem:[#allocation2 + $0x30] sm:$0xff] %v194
      %209 = vst [vmem:[#allocation2 + $0x38] sm:$0xff] %v199
    $region37: #{tpu_custom_call.1} parent=1 // pred_fallthru
      _
    %v210 = vld [vmem:[#allocation3] sm:$0xff]
    %v211 = vld [vmem:[#allocation3 + $0x8] sm:$0xff]
    %v212 = vld [vmem:[#allocation3 + $0x10] sm:$0xff]
    %v213 = vld [vmem:[#allocation3 + $0x18] sm:$0xff]
    %v214 = vld [vmem:[#allocation3 + $0x20] sm:$0xff]
    %v215 = vld [vmem:[#allocation3 + $0x28] sm:$0xff]
    %v216 = vld [vmem:[#allocation3 + $0x30] sm:$0xff]
    %v217 = vld [vmem:[#allocation3 + $0x38] sm:$0xff]
    %v218 = vld [vmem:[#allocation2] sm:$0xff]
    %v219 = vld [vmem:[#allocation2 + $0x8] sm:$0xff]
    %v220 = vld [vmem:[#allocation2 + $0x10] sm:$0xff]
    %v221 = vld [vmem:[#allocation2 + $0x18] sm:$0xff]
    %v222 = vld [vmem:[#allocation2 + $0x20] sm:$0xff]
    %v223 = vld [vmem:[#allocation2 + $0x28] sm:$0xff]
    %v224 = vld [vmem:[#allocation2 + $0x30] sm:$0xff]
    %v225 = vld [vmem:[#allocation2 + $0x38] sm:$0xff]
    %v226 = vld [vmem:[%s4] sm:$0x1]
    %v228 = vlaneseq
    %v229 = vshrl.u32 %v228, 7
    %v230 = vsub.s32 0, %v229
    %v231 = vrot.slane %v226, %v230
    %vm233 = vcmask 523264
    %v235 = vsel %vm233, %v210, 0
    %v238 = vsel %vm233, %v211, 0
    %v241 = vsel %vm233, %v212, 0
    %v244 = vsel %vm233, %v213, 0
    %v247 = vsel %vm233, %v214, 0
    %v250 = vsel %vm233, %v215, 0
    %v253 = vsel %vm233, %v216, 0
    %v256 = vsel %vm233, %v217, 0
    %258 = vmatprep.subr.mxu0 0.0
    %259 = vmatpush1.msra.mxu0 %v218
    %260 = vmatprep.subr.mxu0 0.0
    %261 = vmatpush1.msra.mxu0 %v219
    %262 = vmatprep.subr.mxu0 0.0
    %263 = vmatpush1.msra.mxu0 %v220
    %264 = vmatprep.subr.mxu0 0.0
    %265 = vmatpush1.msra.mxu0 %v221
    %266 = vmatprep.subr.mxu0 0.0
    %267 = vmatpush1.msra.mxu0 %v222
    %268 = vmatprep.subr.mxu0 0.0
    %269 = vmatpush1.msra.mxu0 %v223
    %270 = vmatprep.subr.mxu0 0.0
    %271 = vmatpush1.msra.mxu0 %v224
    %272 = vmatprep.subr.mxu0 0.0
    %273 = vmatpush1.msra.mxu0 %v225
    %274 = vmatprep.subr.mxu0 0.0
    %275 = vmatpush1.msra.mxu0 0.0
    %276 = vmatprep.subr.mxu0 0.0
    %277 = vmatpush1.msra.mxu0 0.0
    %278 = vmatprep.subr.mxu0 0.0
    %279 = vmatpush1.msra.mxu0 0.0
    %280 = vmatprep.subr.mxu0 0.0
    %281 = vmatpush1.msra.mxu0 0.0
    %282 = vmatprep.subr.mxu0 0.0
    %283 = vmatpush1.msra.mxu0 0.0
    %284 = vmatprep.subr.mxu0 0.0
    %285 = vmatpush1.msra.mxu0 0.0
    %286 = vmatprep.subr.mxu0 0.0
    %287 = vmatpush1.msra.mxu0 0.0
    %288 = vmatprep.subr.mxu0 0.0
    %289 = vmatpush1.msra.mxu0 0.0
    %290 = vmatprep.subr.mxu0 0.0
    %291 = vmatpush1.msra.mxu0 0.0
    %292 = vmatprep.subr.mxu0 0.0
    %293 = vmatpush1.msra.mxu0 0.0
    %294 = vmatprep.subr.mxu0 0.0
    %295 = vmatpush1.msra.mxu0 0.0
    %296 = vmatprep.subr.mxu0 0.0
    %297 = vmatpush1.msra.mxu0 0.0
    %298 = vmatprep.subr.mxu0 0.0
    %299 = vmatpush1.msra.mxu0 0.0
    %300 = vmatprep.subr.mxu0 0.0
    %301 = vmatpush1.msra.mxu0 0.0
    %302 = vmatprep.subr.mxu0 0.0
    %303 = vmatpush1.msra.mxu0 0.0
    %304 = vmatprep.subr.mxu0 0.0
    %305 = vmatpush1.msra.mxu0 0.0
    %306 = vmatprep.subr.mxu0 0.0
    %307 = vmatpush1.msra.mxu0 0.0
    %308 = vmatprep.subr.mxu0 0.0
    %309 = vmatpush1.msra.mxu0 0.0
    %310 = vmatprep.subr.mxu0 0.0
    %311 = vmatpush1.msra.mxu0 0.0
    %312 = vmatprep.subr.mxu0 0.0
    %313 = vmatpush1.msra.mxu0 0.0
    %314 = vmatprep.subr.mxu0 0.0
    %315 = vmatpush1.msra.mxu0 0.0
    %316 = vmatprep.subr.mxu0 0.0
    %317 = vmatpush1.msra.mxu0 0.0
    %318 = vmatprep.subr.mxu0 0.0
    %319 = vmatpush1.msra.mxu0 0.0
    %320 = vmatprep.subr.mxu0 0.0
    %321 = vmatpush1.msra.mxu0 0.0
    %322 = vmatprep.mubr.f32.mxu0 0.0
    %323 = vmatmul.mubr.f32.gmra.mrb[0].mxu0 %v235
    %v324 = vpop.f32.mrb[0].mxu0
    %v325 = vadd.f32 %v231, %v324
    %v326 = vpop.f32.mrb[0].mxu0
    %327 = vmatprep.mubr.f32.mxu0 0.0
    %328 = vmatmul.mubr.f32.gmra.mrb[0].mxu0 %v238
    %v329 = vpop.f32.mrb[0].mxu0
    %v330 = vadd.f32 %v231, %v329
    %v331 = vpop.f32.mrb[0].mxu0
    %332 = vmatprep.mubr.f32.mxu0 0.0
    %333 = vmatmul.mubr.f32.gmra.mrb[0].mxu0 %v241
    %v334 = vpop.f32.mrb[0].mxu0
    %v335 = vadd.f32 %v231, %v334
    %v336 = vpop.f32.mrb[0].mxu0
    %337 = vmatprep.mubr.f32.mxu0 0.0
    %338 = vmatmul.mubr.f32.gmra.mrb[0].mxu0 %v244
    %v339 = vpop.f32.mrb[0].mxu0
    %v340 = vadd.f32 %v231, %v339
    %v341 = vpop.f32.mrb[0].mxu0
    %342 = vmatprep.mubr.f32.mxu0 0.0
    %343 = vmatmul.mubr.f32.gmra.mrb[0].mxu0 %v247
    %v344 = vpop.f32.mrb[0].mxu0
    %v345 = vadd.f32 %v231, %v344
    %v346 = vpop.f32.mrb[0].mxu0
    %347 = vmatprep.mubr.f32.mxu0 0.0
    %348 = vmatmul.mubr.f32.gmra.mrb[0].mxu0 %v250
    %v349 = vpop.f32.mrb[0].mxu0
    %v350 = vadd.f32 %v231, %v349
    %v351 = vpop.f32.mrb[0].mxu0
    %352 = vmatprep.mubr.f32.mxu0 0.0
    %353 = vmatmul.mubr.f32.gmra.mrb[0].mxu0 %v253
    %v354 = vpop.f32.mrb[0].mxu0
    %v355 = vadd.f32 %v231, %v354
    %v356 = vpop.f32.mrb[0].mxu0
    %357 = vmatprep.mubr.f32.mxu0 0.0
    %358 = vmatmul.mubr.f32.gmra.mrb[0].mxu0 %v256
    %v359 = vpop.f32.mrb[0].mxu0
    %v360 = vadd.f32 %v231, %v359
    %v361 = vpop.f32.mrb[0].mxu0
    %362 = vdwg.mxu0
    %363 = vst [vmem:[#allocation9] sm:$0xff] %v325
    %364 = vst [vmem:[#allocation9 + $0x8] sm:$0xff] %v330
    %365 = vst [vmem:[#allocation9 + $0x10] sm:$0xff] %v335
    %366 = vst [vmem:[#allocation9 + $0x18] sm:$0xff] %v340
    %367 = vst [vmem:[#allocation9 + $0x20] sm:$0xff] %v345
    %368 = vst [vmem:[#allocation9 + $0x28] sm:$0xff] %v350
    %369 = vst [vmem:[#allocation9 + $0x30] sm:$0xff] %v355
    %370 = vst [vmem:[#allocation9 + $0x38] sm:$0xff] %v360
    // Predicated region
    $region38: #{tpu_custom_call.1} parent=1 // pred_check
      _
    $region39: #{tpu_custom_call.1} parent=1 // pred_check_branch
      %372 = sbr.rel (0) target = $region41
    $region40: #{tpu_custom_call.1} parent=1 // pred_region
      %s374 = ssub.s32 1024, 1024
      %375 = vsyncadd [#allocation5], %s374
      %s376 = sshll.u32 [#allocation9], 4
      %s377 = int_to_ptr.vmem [resolvable:$true] %s376
      %382 = dma.vmem_to_hbm [thread:$0]  %s377, 1024, %s5, [#allocation5], 128, 128, 8
    $region41: #{tpu_custom_call.1} parent=1 // pred_fallthru
      _
    // Predicated region
    $region42: #{tpu_custom_call.1} parent=1 // pred_check
      _
    $region43: #{tpu_custom_call.1} parent=1 // pred_check_branch
      %384 = sbr.rel (0) target = $region45
    $region44: #{tpu_custom_call.1} parent=1 // pred_region
      %385 = dma.done [#allocation5], 1024
    $region45: #{tpu_custom_call.1} parent=1 // pred_fallthru
      _
    %386 = vsyncpa [#allocation4], 1
    %387 = vsyncpa [#allocation7], 1
    %388 = vsyncpa [#allocation5], 1

</llo_original>
